<compile_context>
chip_gen: v6e
topology: v6e:2x2x1
jax: 0.10.0
libtpu: 0.0.40
codegen_flags: <defaults>
</compile_context>

<pallas_src>
import functools

import jax
import jax.numpy as jnp
from jax.experimental import pallas as pl
from jax.experimental.pallas import tpu as pltpu

_SUBLANE_PAD = 8     # per-split partial outputs padded to 8 sublanes for legal tiling
_MAX_BLOCK_B = 1024  # measured HBM-pipeline plateau (512 rows -> ~85%, 1024 -> ~86%)


def _detect_tpu():
    """Returns (physical VMEM bytes, tensorcores worth sharding over)."""
    kind = ""
    try:
        kind = jax.devices()[0].device_kind.lower()
    except Exception:
        pass
    vmem_cap = None
    try:
        vmem_cap = int(getattr(pltpu.get_tpu_info(), "vmem_capacity_bytes", 0)) or None
    except Exception:
        vmem_cap = None
    if vmem_cap is None:
        # v7x: 64 MiB / TensorCore; v5e / v6e: 128 MiB.  Unknown -> conservative.
        vmem_cap = (64 << 20) if "v7" in kind else (128 << 20)
    n_cores = 2 if "v7" in kind else 1  # only v7x has 2 TCs per chip
    return vmem_cap, n_cores


def _choose_block_b(batch, num_classes, dtype_itemsize, vmem_limit_bytes):
    """Batch-tile rows, sized against the *real* VMEM working set:
       2 inputs x 2 pipeline buffers in the input dtype (bf16 halves this)
       plus ~4 f32 temporaries of the (block_b, C) tile inside the kernel
       (x.astype, t.astype, exp(x - m), x * t)."""
    per_row = 2 * 2 * num_classes * dtype_itemsize + 4 * num_classes * 4
    budget = int(vmem_limit_bytes * 0.8)   # headroom under the scoped limit
    rows = budget // per_row
    rows = min(rows, _MAX_BLOCK_B)
    if rows >= batch:
        return batch                        # full-extent block: always legal
    # TODO(synk): class-axis tiling (online LSE) when even 8 rows won't fit.
    rows = max(8, (rows // 8) * 8)          # multiple of 8 sublanes
    return min(rows, batch)


def _hard_bootstrap_kernel(out_ref, tgt_ref, ce_ref, hard_ref, *,
                           batch_size, block_b, inner_tiles, needs_mask):
    p = pl.program_id(0)  # core-split axis ("parallel")
    i = pl.program_id(1)  # batch-tile axis ("arbitrary" -> resident accumulator)

    @pl.when(i == 0)
    def _zero():
        ce_ref[...] = jnp.zeros_like(ce_ref)
        hard_ref[...] = jnp.zeros_like(hard_ref)

    x = out_ref[...].astype(jnp.float32)  # (block_b, C)
    t = tgt_ref[...].astype(jnp.float32)  # (block_b, C)

    # Numerically stable row-wise log-sum-exp.
    m = jnp.max(x, axis=1, keepdims=True)                               # (TB, 1)
    lse = jnp.log(jnp.sum(jnp.exp(x - m), axis=1, keepdims=True)) + m   # (TB, 1)

    # Per-row loss contributions, without materializing log_softmax:
    #   -sum_c ls*t          = lse * sum_c(t) - sum_c(x*t)
    #   -ls[argmax softmax]  = -max_c ls = lse - m
    ce_rows = (lse * jnp.sum(t, axis=1, keepdims=True)
               - jnp.sum(x * t, axis=1, keepdims=True))                 # (TB, 1)
    hard_rows = lse - m                                                 # (TB, 1)

    def _accumulate(ce_r, hard_r):
        # Broadcast the (1,1) partial sum into the 8-sublane resident block.
        ce_ref[...] += jnp.sum(ce_r, keepdims=True)
        hard_ref[...] += jnp.sum(hard_r, keepdims=True)

    if needs_mask:
        # Only ragged / clamped-overshoot tiles pay for the iota + selects.
        row0 = (p * inner_tiles + i) * block_b
        is_full = row0 + block_b <= batch_size

        @pl.when(is_full)
        def _full():
            _accumulate(ce_rows, hard_rows)

        @pl.when(jnp.logical_not(is_full))
        def _ragged():
            rows = row0 + jax.lax.broadcasted_iota(jnp.int32, (block_b, 1), 0)
            valid = rows < batch_size
            _accumulate(jnp.where(valid, ce_rows, 0.0),
                        jnp.where(valid, hard_rows, 0.0))
    else:
        _accumulate(ce_rows, hard_rows)


def _loss_sums(outputs, targets, *, block_b=None, num_core_splits=None):
    """Returns (sum of CE term, sum of hard-bootstrapping term), unnormalized."""
    B, C = outputs.shape
    vmem_cap, n_cores = _detect_tpu()
    # Explicit scoped-VMEM limit: ~96 MiB on v5e/v6e, ~48 MiB on v7x.
    vmem_limit = (vmem_cap * 3) // 4

    if block_b is None:
        block_b = _choose_block_b(B, C, outputs.dtype.itemsize, vmem_limit)
    total_tiles = pl.cdiv(B, block_b)

    if num_core_splits is None:
        num_core_splits = n_cores
    # On single-TC chips the "parallel" axis is just a serial loop, and on tiny
    # grids a 2-way split only duplicates DMAs -- drop it in both cases.
    if total_tiles < 2 * num_core_splits:
        num_core_splits = 1

    inner_tiles = pl.cdiv(total_tiles, num_core_splits)
    last_tile = total_tiles - 1
    overshoots = (total_tiles % num_core_splits) != 0
    needs_mask = (B % block_b != 0) or overshoots

    if overshoots:
        # Clamp so the (single) overshooting split never DMAs past the array;
        # the kernel's row mask zeroes that tile's contribution.
        def in_map(p, i):
            return (jnp.minimum(p * inner_tiles + i, last_tile), 0)
    else:
        def in_map(p, i):
            return (p * inner_tiles + i, 0)

    def out_map(p, i):
        return (p, 0)  # constant across the inner axis -> resident accumulator

    kernel = functools.partial(
        _hard_bootstrap_kernel,
        batch_size=B, block_b=block_b, inner_tiles=inner_tiles,
        needs_mask=needs_mask)

    ce_part, hard_part = pl.pallas_call(
        kernel,
        grid=(num_core_splits, inner_tiles),
        in_specs=[
            pl.BlockSpec((block_b, C), in_map),
            pl.BlockSpec((block_b, C), in_map),
        ],
        out_specs=(
            pl.BlockSpec((_SUBLANE_PAD, 1), out_map),
            pl.BlockSpec((_SUBLANE_PAD, 1), out_map),
        ),
        out_shape=(
            jax.ShapeDtypeStruct((num_core_splits * _SUBLANE_PAD, 1), jnp.float32),
            jax.ShapeDtypeStruct((num_core_splits * _SUBLANE_PAD, 1), jnp.float32),
        ),
        compiler_params=pltpu.CompilerParams(
            dimension_semantics=("parallel", "arbitrary"),
            vmem_limit_bytes=int(vmem_limit)),
    )(outputs, targets)

    # Each split replicates its partial across the 8 padded sublanes; take row 0
    # of every split and sum the per-split partials.
    ce_sum = jnp.sum(ce_part[::_SUBLANE_PAD, 0])
    hard_sum = jnp.sum(hard_part[::_SUBLANE_PAD, 0])
    return ce_sum, hard_sum


def hard_bootstrapping(outputs, targets, epoch, *, beta, checkpoint,
                       block_b=None, num_core_splits=None):
    """Forward pass of HardBootstrapping(beta, checkpoint)."""
    B = outputs.shape[0]
    ce_sum, hard_sum = _loss_sums(outputs, targets, block_b=block_b,
                                  num_core_splits=num_core_splits)
    loss_ce = ce_sum / B
    loss_hard = hard_sum / B
    if epoch < checkpoint:  # epoch is a Python int, as in the nn.Module
        return loss_ce
    return beta * loss_ce + (1.0 - beta) * loss_hard


def _reference(outputs, targets, epoch, *, beta, checkpoint):
    ls = jax.nn.log_softmax(outputs.astype(jnp.float32), axis=1)
    B = outputs.shape[0]
    loss_ce = -jnp.sum(ls * targets.astype(jnp.float32)) / B
    if epoch < checkpoint:
        return loss_ce
    hard_idx = jnp.argmax(jax.nn.softmax(outputs.astype(jnp.float32), axis=1), axis=1)
    loss_hard = -jnp.sum(jnp.take_along_axis(ls, hard_idx[:, None], axis=1)) / B
    return beta * loss_ce + (1.0 - beta) * loss_hard


if __name__ == "__main__":
    key = jax.random.PRNGKey(0)
    k1, k2, k3, k4, k5, k6 = jax.random.split(key, 6)
    beta, checkpoint = 0.8, 3

    # --- Test 1: small aligned shape, both epoch branches, f32 inputs. ---
    B, C = 8, 32
    outputs = jax.random.normal(k1, (B, C), dtype=jnp.float32) * 2.0
    targets = jax.nn.softmax(jax.random.normal(k2, (B, C), dtype=jnp.float32), axis=1)

    loss_early = hard_bootstrapping(outputs, targets, epoch=1, beta=beta, checkpoint=checkpoint)
    loss_late = hard_bootstrapping(outputs, targets, epoch=5, beta=beta, checkpoint=checkpoint)
    jax.block_until_ready(loss_early)
    jax.block_until_ready(loss_late)
    ref_early = _reference(outputs, targets, 1, beta=beta, checkpoint=checkpoint)
    ref_late = _reference(outputs, targets, 5, beta=beta, checkpoint=checkpoint)
    assert jnp.allclose(loss_early, ref_early, rtol=1e-5, atol=1e-5), (loss_early, ref_early)
    assert jnp.allclose(loss_late, ref_late, rtol=1e-5, atol=1e-5), (loss_late, ref_late)

    # --- Test 2: ragged batch (B not a multiple of the tile), multi-tile
    #     pipeline; exercises the masked ragged-tile path. ---
    B2, C2 = 20, 32
    outputs2 = jax.random.normal(k3, (B2, C2), dtype=jnp.float32) * 1.5
    targets2 = jax.nn.softmax(jax.random.normal(k4, (B2, C2), dtype=jnp.float32), axis=1)
    loss2 = hard_bootstrapping(outputs2, targets2, epoch=7, beta=beta, checkpoint=checkpoint,
                               block_b=8)
    jax.block_until_ready(loss2)
    ref2 = _reference(outputs2, targets2, 7, beta=beta, checkpoint=checkpoint)
    assert jnp.allclose(loss2, ref2, rtol=1e-5, atol=1e-5), (loss2, ref2)

    # --- Test 3: bf16 logits/targets (half the HBM traffic; f32 accumulation). ---
    loss_bf16 = hard_bootstrapping(outputs.astype(jnp.bfloat16), targets.astype(jnp.bfloat16),
                                   epoch=5, beta=beta, checkpoint=checkpoint)
    jax.block_until_ready(loss_bf16)
    ref_bf16 = _reference(outputs.astype(jnp.bfloat16), targets.astype(jnp.bfloat16), 5,
                          beta=beta, checkpoint=checkpoint)
    assert jnp.allclose(loss_bf16, ref_bf16, rtol=1e-4, atol=1e-4), (loss_bf16, ref_bf16)

    # --- Test 4: explicit 2-way core split with an even tile count
    #     (statically mask-free fast path, no overshoot, no clamps). ---
    B4, C4 = 64, 128
    outputs4 = jax.random.normal(k5, (B4, C4), dtype=jnp.float32)
    targets4 = jax.nn.softmax(jax.random.normal(k6, (B4, C4), dtype=jnp.float32), axis=1)
    loss4 = hard_bootstrapping(outputs4, targets4, epoch=9, beta=beta, checkpoint=checkpoint,
                               block_b=8, num_core_splits=2)
    jax.block_until_ready(loss4)
    ref4 = _reference(outputs4, targets4, 9, beta=beta, checkpoint=checkpoint)
    assert jnp.allclose(loss4, ref4, rtol=1e-5, atol=1e-5), (loss4, ref4)

    # --- Test 5: explicit 2-way core split with an odd tile count (one clamped,
    #     fully masked overshoot tile on the second split). ---
    loss5 = hard_bootstrapping(outputs4[:56], targets4[:56], epoch=9, beta=beta,
                               checkpoint=checkpoint, block_b=8, num_core_splits=2)
    jax.block_until_ready(loss5)
    ref5 = _reference(outputs4[:56], targets4[:56], 9, beta=beta, checkpoint=checkpoint)
    assert jnp.allclose(loss5, ref5, rtol=1e-5, atol=1e-5), (loss5, ref5)

    print("KERNEL_OK")
</pallas_src>

<mosaic_0001>
module attributes {stable_mosaic.version = 11 : i64} {
  func.func @_hard_bootstrap_kernel(%arg0: i32, %arg1: i32, %arg2: memref<8x32xf32, #tpu.memory_space<vmem>>, %arg3: memref<8x32xf32, #tpu.memory_space<vmem>>, %arg4: memref<8x1xf32, #tpu.memory_space<vmem>>, %arg5: memref<8x1xf32, #tpu.memory_space<vmem>>) attributes {dimension_semantics = [#tpu.dimension_semantics<parallel>, #tpu.dimension_semantics<arbitrary>], iteration_bounds = array<i64: 1, 1>, scalar_prefetch = 0 : i64, scratch_operands = 0 : i64, tpu.core_type = #tpu.core_type<tc>, window_params = [{transform_indices = @transform_0, window_bounds = array<i64: 8, 32>}, {transform_indices = @transform_1, window_bounds = array<i64: 8, 32>}, {transform_indices = @transform_2, window_bounds = array<i64: 8, 1>}, {transform_indices = @transform_3, window_bounds = array<i64: 8, 1>}]} {
    %c0_i32 = arith.constant 0 : i32
    %0 = arith.cmpi eq, %arg1, %c0_i32 : i32
    %1 = arith.extui %0 : i1 to i32
    %c0_i32_0 = arith.constant 0 : i32
    %2 = arith.cmpi ne, %1, %c0_i32_0 : i32
    scf.if %2 {
      %cst_17 = arith.constant 0.000000e+00 : f32
      %40 = vector.broadcast %cst_17 : f32 to vector<8x1xf32>
      %c0_18 = arith.constant 0 : index
      %c0_19 = arith.constant 0 : index
      %41 = vector.load %arg4[%c0_18, %c0_19] : memref<8x1xf32, #tpu.memory_space<vmem>>, vector<8x1xf32>
      tpu.vector_store %arg4[%c0_18, %c0_19], %40 {strides = array<i32>} : memref<8x1xf32, #tpu.memory_space<vmem>>, vector<8x1xf32>,
      %cst_20 = arith.constant 0.000000e+00 : f32
      %42 = vector.broadcast %cst_20 : f32 to vector<8x1xf32>
      %c0_21 = arith.constant 0 : index
      %c0_22 = arith.constant 0 : index
      %43 = vector.load %arg5[%c0_21, %c0_22] : memref<8x1xf32, #tpu.memory_space<vmem>>, vector<8x1xf32>
      tpu.vector_store %arg5[%c0_21, %c0_22], %42 {strides = array<i32>} : memref<8x1xf32, #tpu.memory_space<vmem>>, vector<8x1xf32>,
    } else {
    }
    %c0 = arith.constant 0 : index
    %c0_1 = arith.constant 0 : index
    %3 = vector.load %arg2[%c0, %c0_1] : memref<8x32xf32, #tpu.memory_space<vmem>>, vector<8x32xf32>
    %c0_2 = arith.constant 0 : index
    %c0_3 = arith.constant 0 : index
    %4 = vector.load %arg3[%c0_2, %c0_3] : memref<8x32xf32, #tpu.memory_space<vmem>>, vector<8x32xf32>
    %cst = arith.constant dense<0xFF800000> : vector<8xf32>
    %5 = vector.multi_reduction <maximumf>, %3, %cst [1] : vector<8x32xf32> to vector<8xf32>
    %6 = vector.shape_cast %5 : vector<8xf32> to vector<8x1xf32>
    %7 = vector.broadcast %6 : vector<8x1xf32> to vector<8x32xf32>
    %8 = arith.subf %3, %7 : vector<8x32xf32>
    %9 = math.exp %8 : vector<8x32xf32>
    %cst_4 = arith.constant dense<0.000000e+00> : vector<8xf32>
    %10 = vector.multi_reduction <add>, %9, %cst_4 [1] : vector<8x32xf32> to vector<8xf32>
    %11 = vector.shape_cast %10 : vector<8xf32> to vector<8x1xf32>
    %12 = math.log %11 : vector<8x1xf32>
    %13 = arith.addf %12, %6 : vector<8x1xf32>
    %cst_5 = arith.constant dense<0.000000e+00> : vector<8xf32>
    %14 = vector.multi_reduction <add>, %4, %cst_5 [1] : vector<8x32xf32> to vector<8xf32>
    %15 = vector.shape_cast %14 : vector<8xf32> to vector<8x1xf32>
    %16 = arith.mulf %13, %15 : vector<8x1xf32>
    %17 = arith.mulf %3, %4 : vector<8x32xf32>
    %cst_6 = arith.constant dense<0.000000e+00> : vector<8xf32>
    %18 = vector.multi_reduction <add>, %17, %cst_6 [1] : vector<8x32xf32> to vector<8xf32>
    %19 = vector.shape_cast %18 : vector<8xf32> to vector<8x1xf32>
    %20 = arith.subf %16, %19 : vector<8x1xf32>
    %21 = arith.subf %13, %6 : vector<8x1xf32>
    %c0_7 = arith.constant 0 : index
    %c0_8 = arith.constant 0 : index
    %22 = vector.load %arg4[%c0_7, %c0_8] : memref<8x1xf32, #tpu.memory_space<vmem>>, vector<8x1xf32>
    %23 = vector.shape_cast %20 : vector<8x1xf32> to vector<1x8x1xf32>
    %cst_9 = arith.constant dense<0.000000e+00> : vector<1xf32>
    %24 = vector.multi_reduction <add>, %23, %cst_9 [1, 2] : vector<1x8x1xf32> to vector<1xf32>
    %25 = vector.shape_cast %24 : vector<1xf32> to vector<1x1x1xf32>
    %26 = vector.extract %25[0, 0, 0] : f32 from vector<1x1x1xf32>
    %27 = vector.broadcast %26 : f32 to vector<1x1xf32>
    %28 = vector.broadcast %27 : vector<1x1xf32> to vector<8x1xf32>
    %29 = arith.addf %22, %28 : vector<8x1xf32>
    %c0_10 = arith.constant 0 : index
    %c0_11 = arith.constant 0 : index
    %30 = vector.load %arg4[%c0_10, %c0_11] : memref<8x1xf32, #tpu.memory_space<vmem>>, vector<8x1xf32>
    tpu.vector_store %arg4[%c0_10, %c0_11], %29 {strides = array<i32>} : memref<8x1xf32, #tpu.memory_space<vmem>>, vector<8x1xf32>,
    %c0_12 = arith.constant 0 : index
    %c0_13 = arith.constant 0 : index
    %31 = vector.load %arg5[%c0_12, %c0_13] : memref<8x1xf32, #tpu.memory_space<vmem>>, vector<8x1xf32>
    %32 = vector.shape_cast %21 : vector<8x1xf32> to vector<1x8x1xf32>
    %cst_14 = arith.constant dense<0.000000e+00> : vector<1xf32>
    %33 = vector.multi_reduction <add>, %32, %cst_14 [1, 2] : vector<1x8x1xf32> to vector<1xf32>
    %34 = vector.shape_cast %33 : vector<1xf32> to vector<1x1x1xf32>
    %35 = vector.extract %34[0, 0, 0] : f32 from vector<1x1x1xf32>
    %36 = vector.broadcast %35 : f32 to vector<1x1xf32>
    %37 = vector.broadcast %36 : vector<1x1xf32> to vector<8x1xf32>
    %38 = arith.addf %31, %37 : vector<8x1xf32>
    %c0_15 = arith.constant 0 : index
    %c0_16 = arith.constant 0 : index
    %39 = vector.load %arg5[%c0_15, %c0_16] : memref<8x1xf32, #tpu.memory_space<vmem>>, vector<8x1xf32>
    tpu.vector_store %arg5[%c0_15, %c0_16], %38 {strides = array<i32>} : memref<8x1xf32, #tpu.memory_space<vmem>>, vector<8x1xf32>,
    return
  }
  func.func @transform_0(%arg0: i32, %arg1: i32) -> (i32, i32) {
    %c1_i32 = arith.constant 1 : i32
    %0 = arith.muli %arg0, %c1_i32 : i32
    %1 = arith.addi %0, %arg1 : i32
    %c0_i32 = arith.constant 0 : i32
    %c0_i32_0 = arith.constant 0 : i32
    return %1, %c0_i32 : i32, i32
  }
  func.func @transform_1(%arg0: i32, %arg1: i32) -> (i32, i32) {
    %c1_i32 = arith.constant 1 : i32
    %0 = arith.muli %arg0, %c1_i32 : i32
    %1 = arith.addi %0, %arg1 : i32
    %c0_i32 = arith.constant 0 : i32
    %c0_i32_0 = arith.constant 0 : i32
    return %1, %c0_i32 : i32, i32
  }
  func.func @transform_2(%arg0: i32, %arg1: i32) -> (i32, i32) {
    %c0_i32 = arith.constant 0 : i32
    %c0_i32_0 = arith.constant 0 : i32
    return %arg0, %c0_i32 : i32, i32
  }
  func.func @transform_3(%arg0: i32, %arg1: i32) -> (i32, i32) {
    %c0_i32 = arith.constant 0 : i32
    %c0_i32_0 = arith.constant 0 : i32
    return %arg0, %c0_i32 : i32, i32
  }
}

</mosaic_0001>

<llo_original>
// kernel: tpu_custom_call.1
$region0: #{tpu_custom_call.1}
  #allocation0 [shape = 'u32[]', space=smem, size = 0x4, offset = 0x4, fixed_abs, tag = 'smem constant byte address 0x4 - core index']
  #allocation1 [shape = 'u32[144,128]{1,0:T(1,128)}', space=vmem, size = 0x12000, scoped, tag = 'internal scratch']
  %s0 = inlined_call_operand.hbm [shape: f32[8,32], index: 0, kind: input, shape index: {}]
  %s1 = inlined_call_operand.hbm [shape: f32[8,32], index: 1, kind: input, shape index: {}]
  %s2 = inlined_call_operand.vmem [shape: f32[8,1], index: 2, kind: output, shape index: {0}]
  %s3 = inlined_call_operand.vmem [shape: f32[8,1], index: 3, kind: output, shape index: {1}]
  %4 = xla_tuple %s2, %s3
  %s5 = sld [smem:[#allocation0]]
  $region38: #{tpu_custom_call.1} parent=0
    _
  %s7 = ssub.s32 1, %s5
  %s8 = scalar_select 0, %s7, %s5
  $region1: #{tpu_custom_call.1} parent=0
    #allocation2 [shape = 'u8[4096]{0}', space=vmem, size = 0x1000, scoped, tag = 'input window, operand 0, single buffered']
    #allocation3 [shape = 's32[1]{0}', space=sflag, size = 0x4, scoped, tag = 'scoped memory for tpu_custom_call.1']
    #allocation4 [shape = 'u8[4096]{0}', space=vmem, size = 0x1000, scoped, tag = 'input window, operand 1, single buffered']
    #allocation5 [shape = 's32[1]{0}', space=sflag, size = 0x4, scoped, tag = 'scoped memory for tpu_custom_call.1']
    %9 = vsyncpa [#allocation3], 0
    %10 = vsyncpa [#allocation5], 0
    // Predicated region
    $region2: #{tpu_custom_call.1} parent=1 // pred_check
      _
    $region3: #{tpu_custom_call.1} parent=1 // pred_check_branch
      %12 = sbr.rel (0) target = $region5
    $region4: #{tpu_custom_call.1} parent=1 // pred_region
      %s13 = sadd.s32 0, 0
      %s15 = ssub.s32 128, 128
      %16 = vsyncadd [#allocation3], %s15
      %s17 = smul.addr %s13, 128
      %s18 = scalar_lea.hbm %s0, %s17
      %s20 = sshll.u32 [#allocation2], 4
      %s21 = int_to_ptr.vmem [resolvable:$true] %s20
      %23 = dma.hbm_to_vmem [thread:$0]  %s18, 128, %s21, [#allocation3]
    $region5: #{tpu_custom_call.1} parent=1 // pred_fallthru
      _
    // Predicated region
    $region6: #{tpu_custom_call.1} parent=1 // pred_check
      _
    $region7: #{tpu_custom_call.1} parent=1 // pred_check_branch
      %25 = sbr.rel (0) target = $region9
    $region8: #{tpu_custom_call.1} parent=1 // pred_region
      %s26 = sadd.s32 0, 0
      %s28 = ssub.s32 128, 128
      %29 = vsyncadd [#allocation5], %s28
      %s30 = smul.addr %s26, 128
      %s31 = scalar_lea.hbm %s1, %s30
      %s33 = sshll.u32 [#allocation4], 4
      %s34 = int_to_ptr.vmem [resolvable:$true] %s33
      %36 = dma.hbm_to_vmem [thread:$0]  %s31, 128, %s34, [#allocation5]
    $region9: #{tpu_custom_call.1} parent=1 // pred_fallthru
      _
    // Predicated region
    $region10: #{tpu_custom_call.1} parent=1 // pred_check
      _
    $region11: #{tpu_custom_call.1} parent=1 // pred_check_branch
      %38 = sbr.rel (0) target = $region13
    $region12: #{tpu_custom_call.1} parent=1 // pred_region
      %39 = dma.done [#allocation3], 128
    $region13: #{tpu_custom_call.1} parent=1 // pred_fallthru
      _
    // Predicated region
    $region14: #{tpu_custom_call.1} parent=1 // pred_check
      _
    $region15: #{tpu_custom_call.1} parent=1 // pred_check_branch
      %41 = sbr.rel (0) target = $region17
    $region16: #{tpu_custom_call.1} parent=1 // pred_region
      %42 = dma.done [#allocation5], 128
    $region17: #{tpu_custom_call.1} parent=1 // pred_fallthru
      _
    %s43 = sadd.s32 0, 0
    %s44 = sadd.s32 0, 0
    %p45 = scmp.eq.s32.totalorder 0, 0
    // Predicated region
    $region18: #{tpu_custom_call.1} parent=1 // pred_check
      %p46 = pneg %p45
    $region19: #{tpu_custom_call.1} parent=1 // pred_check_branch
      %48 = sbr.rel (%p46) target = $region21
    $region20: #{tpu_custom_call.1} parent=1 // pred_region
      %vm49 = vcmask 7168
      %50 = vst.msk [vmem:[%s2] sm:$0xff] %vm49, 0.0
      %51 = vst.msk [vmem:[%s3] sm:$0xff] %vm49, 0.0
    $region21: #{tpu_custom_call.1} parent=1 // pred_fallthru
      _
    %v52 = vld [vmem:[#allocation2] sm:$0xff]
    %v53 = vld [vmem:[#allocation4] sm:$0xff]
    %vm54 = vcmask 261120
    %v55 = vsel %vm54, %v52, -inf
    %56 = vmax.xlane.f32.xlu0 %v55
    %v57 = vpop.xlane.xlu0 %56
    %v58 = vsub.f32 %v52, %v57
    %v59 = vmul.f32 %v58, 1.442695
    %v60 = vpow.pop %v59
    %v61 = vsel %vm54, %v60, 0.0
    %62 = vadd.xlane.f32.xlu0 %v61
    %v63 = vpop.xlane.xlu0 %62
    %v64 = vlog2.pop %v63
    %v65 = vmul.f32 %v64, 0.6931472
    %v66 = vadd.f32 %v65, %v57
    %v67 = vsel %vm54, %v53, 0.0
    %68 = vadd.xlane.f32.xlu0 %v67
    %v69 = vpop.xlane.xlu0 %68
    %v70 = vmul.f32 %v66, %v69
    %v71 = vmul.f32 %v52, %v53
    %v72 = vsel %vm54, %v71, 0.0
    %73 = vadd.xlane.f32.xlu0 %v72
    %v74 = vpop.xlane.xlu0 %73
    %v75 = vsub.f32 %v70, %v74
    %v76 = vsub.f32 %v66, %v57
    %v77 = vld [vmem:[%s2] sm:$0xff]
    %vm78 = vcmask 7168
    %v79 = vsel %vm78, %v75, 0.0
    %80 = vadd.xlane.f32.xlu0 %v79
    %v81 = vpop.xlane.xlu0 %80
    %v82 = vrot.slane %v81, 4
    %v83 = vadd.f32 %v81, %v82
    %v84 = vrot.slane %v83, 2
    %v85 = vadd.f32 %v83, %v84
    %v86 = vrot.slane %v85, 1
    %v87 = vadd.f32 %v85, %v86
    %s88 = vtos %v87
    %v89 = vstv %s88
    %v90 = vadd.f32 %v77, %v89
    %91 = vst.msk [vmem:[%s2] sm:$0xff] %vm78, %v90
    %v92 = vld [vmem:[%s3] sm:$0xff]
    %v93 = vsel %vm78, %v76, 0.0
    %94 = vadd.xlane.f32.xlu0 %v93
    %v95 = vpop.xlane.xlu0 %94
    %v96 = vrot.slane %v95, 4
    %v97 = vadd.f32 %v95, %v96
    %v98 = vrot.slane %v97, 2
    %v99 = vadd.f32 %v97, %v98
    %v100 = vrot.slane %v99, 1
    %v101 = vadd.f32 %v99, %v100
    %s102 = vtos %v101
    %v103 = vstv %s102
    %v104 = vadd.f32 %v92, %v103
    %105 = vst.msk [vmem:[%s3] sm:$0xff] %vm78, %v104
    // Predicated region
    $region22: #{tpu_custom_call.1} parent=1 // pred_check
      _
    $region23: #{tpu_custom_call.1} parent=1 // pred_check_branch
      %107 = sbr.rel (0) target = $region25
    $region24: #{tpu_custom_call.1} parent=1 // pred_region
      _
    $region25: #{tpu_custom_call.1} parent=1 // pred_fallthru
      _
    // Predicated region
    $region26: #{tpu_custom_call.1} parent=1 // pred_check
      _
    $region27: #{tpu_custom_call.1} parent=1 // pred_check_branch
      %109 = sbr.rel (0) target = $region29
    $region28: #{tpu_custom_call.1} parent=1 // pred_region
      _
    $region29: #{tpu_custom_call.1} parent=1 // pred_fallthru
      _
    // Predicated region
    $region30: #{tpu_custom_call.1} parent=1 // pred_check
      _
    $region31: #{tpu_custom_call.1} parent=1 // pred_check_branch
      %111 = sbr.rel (0) target = $region33
    $region32: #{tpu_custom_call.1} parent=1 // pred_region
      _
    $region33: #{tpu_custom_call.1} parent=1 // pred_fallthru
      _
    // Predicated region
    $region34: #{tpu_custom_call.1} parent=1 // pred_check
      _
    $region35: #{tpu_custom_call.1} parent=1 // pred_check_branch
      %113 = sbr.rel (0) target = $region37
    $region36: #{tpu_custom_call.1} parent=1 // pred_region
      _
    $region37: #{tpu_custom_call.1} parent=1 // pred_fallthru
      _
    %114 = vsyncpa [#allocation3], 1
    %115 = vsyncpa [#allocation5], 1

</llo_original>
